<compile_context>
chip_gen: v7x
topology: tpu7x:2x2x1
jax: 0.10.0
libtpu: 0.0.40
codegen_flags: <defaults>
</compile_context>

<pallas_src>
import jax
import jax.numpy as jnp
from jax.experimental import pallas as pl
from jax.experimental.pallas import tpu as pltpu

MIN_VALUE = 0.3
MAX_VALUE = 0.5

LANES = 128                # lane width of each spatial row tile
MAX_BLOCK_ROWS = 8192      # 8192 x 128 f32 = 4 MiB in / 8 MiB out per block
                           # -> ~24 MiB double-buffered (fits v7x 64 MiB VMEM)


def _conv1x1_clamp_kernel(w_ref, b_ref, x_ref, o_ref):
    # w_ref, b_ref : SMEM (2,) float32 per-output-channel weight / bias
    # x_ref        : VMEM block (r_tile, 128)     -- the single input channel
    # o_ref        : VMEM block (2, r_tile, 128)  -- both output channels
    x = x_ref[...].astype(jnp.float32)
    # Direct plane stores: no jnp.stack, no extra VMEM temp or copy pass.
    o_ref[0] = jnp.clip(x * w_ref[0] + b_ref[0],
                        MIN_VALUE, MAX_VALUE).astype(o_ref.dtype)
    o_ref[1] = jnp.clip(x * w_ref[1] + b_ref[1],
                        MIN_VALUE, MAX_VALUE).astype(o_ref.dtype)


def conv1x1_clamp(x, weight, bias):
    """x: (N, 1, H, W); weight: (2, 1, 1, 1); bias: (2,). Returns (N, 2, H, W)."""
    N, Cin, H, W = x.shape
    assert Cin == 1
    HW = H * W

    # View each image's HW pixels as (rows, 128) so every block is made of
    # full (8,128)-friendly tiles; the (N, 2, rows, 128) output is already the
    # NCHW memory layout, so reshaping back needs no transpose.
    rows = pl.cdiv(HW, LANES)
    hw_pad = rows * LANES

    x2d = x.reshape(N, HW)
    if hw_pad != HW:
        # Pad only the ragged tail (copy pass happens only in the unaligned
        # case; H*W % 128 == 0 inputs take the zero-copy path).
        x2d = jnp.pad(x2d, ((0, 0), (0, hw_pad - HW)))
    x3d = x2d.reshape(N, rows, LANES)

    w_flat = weight.reshape(2).astype(jnp.float32)
    b_flat = bias.reshape(2).astype(jnp.float32)

    # Tile rows: single full-extent tile when it fits (valid even if not a
    # multiple of 8, since it equals the full dim), else 8-aligned max tiles
    # with a partial last block instead of rounding rows up.
    r_tile = rows if rows <= MAX_BLOCK_ROWS else MAX_BLOCK_ROWS
    grid = (N, pl.cdiv(rows, r_tile))

    itemsize = jnp.dtype(x.dtype).itemsize
    block_bytes = r_tile * LANES * itemsize * 3          # 1 in + 2 out planes
    vmem_limit = int(min(100 * 1024 * 1024,
                         max(8 * 1024 * 1024,
                             2 * block_bytes + 8 * 1024 * 1024)))

    out = pl.pallas_call(
        _conv1x1_clamp_kernel,
        out_shape=jax.ShapeDtypeStruct((N, 2, rows, LANES), x.dtype),
        grid=grid,
        in_specs=[
            pl.BlockSpec(memory_space=pltpu.MemorySpace.SMEM),  # weight (2,)
            pl.BlockSpec(memory_space=pltpu.MemorySpace.SMEM),  # bias   (2,)
            pl.BlockSpec((None, r_tile, LANES), lambda n, t: (n, t, 0)),
        ],
        out_specs=pl.BlockSpec((None, 2, r_tile, LANES),
                               lambda n, t: (n, 0, t, 0)),
        compiler_params=pltpu.CompilerParams(
            # TODO(synk): on v7x, CORE_PARALLEL on the row-tile axis would
            # shard this DMA-bound stream across both TensorCores.
            dimension_semantics=("parallel", "parallel"),
            vmem_limit_bytes=vmem_limit,
        ),
    )(w_flat, b_flat, x3d)

    # Free reshape back to NCHW (slice only when the tail was padded).
    out = out.reshape(N, 2, hw_pad)
    if hw_pad != HW:
        out = out[:, :, :HW]
    return out.reshape(N, 2, H, W)


if __name__ == "__main__":
    key = jax.random.PRNGKey(0)
    kx, kw, kb = jax.random.split(key, 3)

    # Small shapes consistent with the module: batch=2, Cin=1, 16x16 spatial.
    N, H, W = 2, 16, 16
    x = jax.random.normal(kx, (N, 1, H, W), dtype=jnp.float32)

    # PyTorch-style uniform init (bound = 1/sqrt(Cin*kh*kw) = 1.0).
    weight = jax.random.uniform(kw, (2, 1, 1, 1), minval=-1.0, maxval=1.0,
                                dtype=jnp.float32)
    bias = jax.random.uniform(kb, (2,), minval=-1.0, maxval=1.0,
                              dtype=jnp.float32)

    out = conv1x1_clamp(x, weight, bias)
    out = jax.block_until_ready(out)

    # Pure-JAX reference: 1x1 conv == broadcasted affine, then clamp.
    ref = x * weight.reshape(1, 2, 1, 1) + bias.reshape(1, 2, 1, 1)
    ref = jnp.clip(ref, MIN_VALUE, MAX_VALUE)

    assert out.shape == (N, 2, H, W)
    assert jnp.allclose(out, ref, atol=1e-6, rtol=1e-6)
    print("KERNEL_OK")
</pallas_src>

<mosaic_0001>
module attributes {stable_mosaic.version = 11 : i64} {
  func.func @_conv1x1_clamp_kernel(%arg0: i32, %arg1: i32, %arg2: memref<2xf32, #tpu.memory_space<smem>>, %arg3: memref<2xf32, #tpu.memory_space<smem>>, %arg4: memref<1x2x128xf32, #tpu.memory_space<vmem>>, %arg5: memref<1x2x2x128xf32, #tpu.memory_space<vmem>>) attributes {dimension_semantics = [#tpu.dimension_semantics<parallel>, #tpu.dimension_semantics<parallel>], iteration_bounds = array<i64: 2, 1>, scalar_prefetch = 0 : i64, scratch_operands = 0 : i64, tpu.core_type = #tpu.core_type<tc>, window_params = [{transform_indices = @transform_0, window_bounds = array<i64: 2>}, {transform_indices = @transform_1, window_bounds = array<i64: 2>}, {transform_indices = @transform_2, window_bounds = array<i64: 1, 2, 128>}, {transform_indices = @transform_3, window_bounds = array<i64: 1, 2, 2, 128>}]} {
    %c0 = arith.constant 0 : index
    %c0_0 = arith.constant 0 : index
    %c0_1 = arith.constant 0 : index
    %0 = vector.load %arg4[%c0, %c0_0, %c0_1] : memref<1x2x128xf32, #tpu.memory_space<vmem>>, vector<1x2x128xf32>
    %1 = vector.shape_cast %0 : vector<1x2x128xf32> to vector<2x128xf32>
    %c0_2 = arith.constant 0 : index
    %2 = memref.load %arg2[%c0_2] : memref<2xf32, #tpu.memory_space<smem>>
    %3 = vector.broadcast %2 : f32 to vector<2x128xf32>
    %4 = arith.mulf %1, %3 : vector<2x128xf32>
    %c0_3 = arith.constant 0 : index
    %5 = memref.load %arg3[%c0_3] : memref<2xf32, #tpu.memory_space<smem>>
    %6 = vector.broadcast %5 : f32 to vector<2x128xf32>
    %7 = arith.addf %4, %6 : vector<2x128xf32>
    %cst = arith.constant 3.000000e-01 : f32
    %cst_4 = arith.constant 5.000000e-01 : f32
    %8 = vector.broadcast %cst : f32 to vector<2x128xf32>
    %9 = arith.maximumf %8, %7 : vector<2x128xf32>
    %10 = vector.broadcast %cst_4 : f32 to vector<2x128xf32>
    %11 = arith.minimumf %10, %9 : vector<2x128xf32>
    %c0_5 = arith.constant 0 : index
    %c0_6 = arith.constant 0 : index
    %c0_7 = arith.constant 0 : index
    %c0_8 = arith.constant 0 : index
    %12 = vector.load %arg5[%c0_5, %c0_6, %c0_7, %c0_8] : memref<1x2x2x128xf32, #tpu.memory_space<vmem>>, vector<1x1x2x128xf32>
    %13 = vector.shape_cast %12 : vector<1x1x2x128xf32> to vector<2x128xf32>
    %14 = vector.shape_cast %11 : vector<2x128xf32> to vector<1x1x2x128xf32>
    tpu.vector_store %arg5[%c0_5, %c0_6, %c0_7, %c0_8], %14 {strides = array<i32>} : memref<1x2x2x128xf32, #tpu.memory_space<vmem>>, vector<1x1x2x128xf32>,
    %c1 = arith.constant 1 : index
    %15 = memref.load %arg2[%c1] : memref<2xf32, #tpu.memory_space<smem>>
    %16 = vector.broadcast %15 : f32 to vector<2x128xf32>
    %17 = arith.mulf %1, %16 : vector<2x128xf32>
    %c1_9 = arith.constant 1 : index
    %18 = memref.load %arg3[%c1_9] : memref<2xf32, #tpu.memory_space<smem>>
    %19 = vector.broadcast %18 : f32 to vector<2x128xf32>
    %20 = arith.addf %17, %19 : vector<2x128xf32>
    %cst_10 = arith.constant 3.000000e-01 : f32
    %cst_11 = arith.constant 5.000000e-01 : f32
    %21 = vector.broadcast %cst_10 : f32 to vector<2x128xf32>
    %22 = arith.maximumf %21, %20 : vector<2x128xf32>
    %23 = vector.broadcast %cst_11 : f32 to vector<2x128xf32>
    %24 = arith.minimumf %23, %22 : vector<2x128xf32>
    %c0_12 = arith.constant 0 : index
    %c1_13 = arith.constant 1 : index
    %c0_14 = arith.constant 0 : index
    %c0_15 = arith.constant 0 : index
    %25 = vector.load %arg5[%c0_12, %c1_13, %c0_14, %c0_15] : memref<1x2x2x128xf32, #tpu.memory_space<vmem>>, vector<1x1x2x128xf32>
    %26 = vector.shape_cast %25 : vector<1x1x2x128xf32> to vector<2x128xf32>
    %27 = vector.shape_cast %24 : vector<2x128xf32> to vector<1x1x2x128xf32>
    tpu.vector_store %arg5[%c0_12, %c1_13, %c0_14, %c0_15], %27 {strides = array<i32>} : memref<1x2x2x128xf32, #tpu.memory_space<vmem>>, vector<1x1x2x128xf32>,
    return
  }
  func.func @transform_0(%arg0: i32, %arg1: i32) -> i32 {
    %c0_i32 = arith.constant 0 : i32
    %c0_i32_0 = arith.constant 0 : i32
    return %c0_i32 : i32
  }
  func.func @transform_1(%arg0: i32, %arg1: i32) -> i32 {
    %c0_i32 = arith.constant 0 : i32
    %c0_i32_0 = arith.constant 0 : i32
    return %c0_i32 : i32
  }
  func.func @transform_2(%arg0: i32, %arg1: i32) -> (i32, i32, i32) {
    %c0_i32 = arith.constant 0 : i32
    %c0_i32_0 = arith.constant 0 : i32
    return %arg0, %arg1, %c0_i32 : i32, i32, i32
  }
  func.func @transform_3(%arg0: i32, %arg1: i32) -> (i32, i32, i32, i32) {
    %c0_i32 = arith.constant 0 : i32
    %c0_i32_0 = arith.constant 0 : i32
    %c0_i32_1 = arith.constant 0 : i32
    return %arg0, %c0_i32, %arg1, %c0_i32_0 : i32, i32, i32, i32
  }
}

</mosaic_0001>

<llo_original>
// kernel: tpu_custom_call.1
$region0: #{tpu_custom_call.1}
  #allocation0 [shape = 'u32[]', space=smem, size = 0x4, offset = 0x4, fixed_abs, tag = 'smem constant byte address 0x4 - core index']
  #allocation1 [shape = 'u32[144,128]{1,0:T(1,128)}', space=vmem, size = 0x12000, scoped, tag = 'internal scratch']
  %s0 = inlined_call_operand.hbm [shape: f32[2], index: 0, kind: input, shape index: {}]
  %s1 = inlined_call_operand.vmem [shape: f32[2], index: 1, kind: input, shape index: {}]
  %s2 = inlined_call_operand.vmem [shape: f32[2,2,128], index: 2, kind: input, shape index: {}]
  %s3 = inlined_call_operand.hbm [shape: f32[2,2,2,128], index: 3, kind: output, shape index: {}]
  %s4 = sld [smem:[#allocation0]]
  $region53: #{tpu_custom_call.1} parent=0
    _
  %s6 = ssub.s32 1, %s4
  %s7 = scalar_select 0, %s6, %s4
  $region1: #{tpu_custom_call.1} parent=0
    #allocation2 [shape = 'u8[512]{0}', space=smem, size = 0x200, scoped, tag = 'input window, operand 0, single buffered']
    #allocation3 [shape = 's32[2]{0}', space=sflag, size = 0x8, scoped, tag = 'scoped memory for tpu_custom_call.1']
    #allocation4 [shape = 's32[2]{0}', space=sflag, size = 0x8, scoped, tag = 'scoped memory for tpu_custom_call.1']
    #allocation5 [shape = 's32[2]{0}', space=sflag, size = 0x8, scoped, tag = 'scoped memory for tpu_custom_call.1']
    #allocation6 [shape = 'u8[512]{0}', space=smem, size = 0x200, scoped, tag = 'input window, operand 1, single buffered']
    #allocation7 [shape = 'u8[4096]{0}', space=vmem, size = 0x1000, scoped, tag = 'output window, operand 0']
    %8 = vsyncpa [#allocation4], 0
    %9 = vsyncpa [#allocation5], 0
    %10 = vsyncpa [#allocation3], 0
    %s11 = scalar_lea.sflag [#allocation3], 1
    %12 = vsyncpa %s11, 0
    loop: start=0, step=1, limit=4
    $region2: #{tpu_custom_call.1} parent=1 // loop_pre_header
      _
    $region3: #{tpu_custom_call.1} parent=1 // loop_header
      %s14 = sphi 0, %s18
      %p15 = scmp.ge.s32.totalorder %s14, 4
      %s21 = sphi 0, %s33
      %s22 = sphi 0, %s29
      %s23 = sphi 0, %s21
      %s24 = sphi 0, %s22
      %s25 = sphi 0, %s23
      %s26 = sphi 0, %s24
      %s34 = sphi 0, %s34
      %s36 = sphi 0, %s34
      %s37 = sphi 0, %s36
      %s51 = sphi 0, %s37
      %s55 = sphi 0, %s55
      %s57 = sphi 0, %s55
      %s58 = sphi 0, %s57
      %s72 = sphi 0, %s58
      %s80 = sphi 0, %s82
      %s83 = sphi 0, %s80
      %s84 = sphi 0, %s83
      %s100 = sphi 0, %s84
      %s108 = sphi 0, %s110
      %s111 = sphi 0, %s108
      %s112 = sphi 0, %s111
      %s128 = sphi 0, %s112
    $region4: #{tpu_custom_call.1} parent=1 // loop_header_branch
      %17 = sbr.rel (%p15) target = $region8
    $region5: #{tpu_custom_call.1} parent=1 // loop_body
      %s19 = ssub.s32 %s14, 1
      %s20 = ssub.s32 %s14, 2
      %s27 = sadd.s32 1, %s22
      %p28 = scmp.ge.s32.totalorder %s27, 1
      %s29 = scalar_select %p28, 0, %s27
      %s30 = sadd.s32 1, %s21
      %s31 = scalar_select %p28, %s30, %s21
      %p32 = scmp.ge.s32.totalorder %s31, 2
      %s33 = scalar_select %p32, 0, %s31
      %s35 = sadd.s32 %s34, 1
      %p38 = scmp.eq.s32.totalorder %s14, 1
      %p39 = scmp.ne.s32.totalorder %s34, %s36
      %p40 = scmp.eq.s32.totalorder %s14, 0
      %p41 = por %p39, %p40
      %p42 = scmp.ne.s32.totalorder %s34, %s36
      %p43 = scmp.eq.s32.totalorder %s19, 1
      %p44 = por %p42, %p43
      %p45 = scmp.ne.s32.totalorder %s36, %s37
      %p46 = scmp.eq.s32.totalorder %s19, 0
      %p47 = por %p45, %p46
      %p48 = scmp.ne.s32.totalorder %s36, %s37
      %p49 = scmp.eq.s32.totalorder %s20, 1
      %p50 = por %p48, %p49
      %p52 = scmp.ne.s32.totalorder %s37, %s51
      %p53 = scmp.eq.s32.totalorder %s20, 0
      %p54 = por %p52, %p53
      %s56 = sadd.s32 %s55, 1
      %p59 = scmp.eq.s32.totalorder %s14, 1
      %p60 = scmp.ne.s32.totalorder %s55, %s57
      %p61 = scmp.eq.s32.totalorder %s14, 0
      %p62 = por %p60, %p61
      %p63 = scmp.ne.s32.totalorder %s55, %s57
      %p64 = scmp.eq.s32.totalorder %s19, 1
      %p65 = por %p63, %p64
      %p66 = scmp.ne.s32.totalorder %s57, %s58
      %p67 = scmp.eq.s32.totalorder %s19, 0
      %p68 = por %p66, %p67
      %p69 = scmp.ne.s32.totalorder %s57, %s58
      %p70 = scmp.eq.s32.totalorder %s20, 1
      %p71 = por %p69, %p70
      %p73 = scmp.ne.s32.totalorder %s58, %s72
      %p74 = scmp.eq.s32.totalorder %s20, 0
      %p75 = por %p73, %p74
      %s76 = ssub.s32 %s21, %s33
      %s77 = ssub.s32 %s22, %s29
      %s78 = sor.u32 %s76, %s77
      %p79 = scmp.eq.s32.totalorder %s78, 0
      %s81 = sadd.s32 %s80, 1
      %s82 = scalar_select %p79, %s80, %s81
      %p85 = pneg %p79
      %p86 = scmp.eq.s32.totalorder %s14, 1
      %p87 = por %p85, %p86
      %p88 = scmp.ne.s32.totalorder %s80, %s83
      %p89 = scmp.eq.s32.totalorder %s14, 0
      %p90 = por %p88, %p89
      %p91 = scmp.ne.s32.totalorder %s80, %s83
      %p92 = scmp.eq.s32.totalorder %s19, 1
      %p93 = por %p91, %p92
      %p94 = scmp.ne.s32.totalorder %s83, %s84
      %p95 = scmp.eq.s32.totalorder %s19, 0
      %p96 = por %p94, %p95
      %p97 = scmp.ne.s32.totalorder %s83, %s84
      %p98 = scmp.eq.s32.totalorder %s20, 1
      %p99 = por %p97, %p98
      %p101 = scmp.ne.s32.totalorder %s84, %s100
      %p102 = scmp.eq.s32.totalorder %s20, 0
      %p103 = por %p101, %p102
      %s104 = ssub.s32 %s21, %s33
      %s105 = ssub.s32 %s22, %s29
      %s106 = sor.u32 %s104, %s105
      %p107 = scmp.eq.s32.totalorder %s106, 0
      %s109 = sadd.s32 %s108, 1
      %s110 = scalar_select %p107, %s108, %s109
      %p113 = pneg %p107
      %p114 = scmp.eq.s32.totalorder %s14, 1
      %p115 = por %p113, %p114
      %p116 = scmp.ne.s32.totalorder %s108, %s111
      %p117 = scmp.eq.s32.totalorder %s14, 0
      %p118 = por %p116, %p117
      %p119 = scmp.ne.s32.totalorder %s108, %s111
      %p120 = scmp.eq.s32.totalorder %s19, 1
      %p121 = por %p119, %p120
      %p122 = scmp.ne.s32.totalorder %s111, %s112
      %p123 = scmp.eq.s32.totalorder %s19, 0
      %p124 = por %p122, %p123
      %p125 = scmp.ne.s32.totalorder %s111, %s112
      %p126 = scmp.eq.s32.totalorder %s20, 1
      %p127 = por %p125, %p126
      %p129 = scmp.ne.s32.totalorder %s112, %s128
      %p130 = scmp.eq.s32.totalorder %s20, 0
      %p131 = por %p129, %p130
      %p132 = scmp.le.s32.totalorder 1, %s14
      %p133 = scmp.lt.s32.totalorder %s14, 3
      %p134 = pnand %p132, %p133
      %p135 = pneg %p134
      // Predicated region
      $region9: #{tpu_custom_call.1} parent=5 // pred_check
        _
      $region10: #{tpu_custom_call.1} parent=5 // pred_check_branch
        %137 = sbr.rel (%p134) target = $region12
      $region11: #{tpu_custom_call.1} parent=5 // pred_region
        %s138 = ssub.s32 %s14, 1
        // Predicated region
        $region13: #{tpu_custom_call.1} parent=11 // pred_check
          %p139 = pneg %p47
        $region14: #{tpu_custom_call.1} parent=11 // pred_check_branch
          %141 = sbr.rel (%p139) target = $region16
        $region15: #{tpu_custom_call.1} parent=11 // pred_region
          %s143 = ssub.s32 16, 16
          %144 = vsyncadd [#allocation4], %s143
          %147 = dma.hbm_to_smem %s0, 16, [#allocation2], [#allocation4]
        $region16: #{tpu_custom_call.1} parent=11 // pred_fallthru
          _
        // Predicated region
        $region17: #{tpu_custom_call.1} parent=11 // pred_check
          %p148 = pneg %p68
        $region18: #{tpu_custom_call.1} parent=11 // pred_check_branch
          %150 = sbr.rel (%p148) target = $region20
        $region19: #{tpu_custom_call.1} parent=11 // pred_region
          %s152 = ssub.s32 16, 16
          %153 = vsyncadd [#allocation5], %s152
          %s155 = sshll.u32 %s1, 4
          %s156 = int_to_ptr.vmem [resolvable:$true] %s155
          %158 = dma.vmem_to_smem %s156, 16, [#allocation6], [#allocation5]
        $region20: #{tpu_custom_call.1} parent=11 // pred_fallthru
          _
      $region12: #{tpu_custom_call.1} parent=5 // pred_fallthru
        _
      %p159 = scmp.lt.s32.totalorder %s14, 2
      // Predicated region
      $region21: #{tpu_custom_call.1} parent=5 // pred_check
        %p160 = pneg %p159
      $region22: #{tpu_custom_call.1} parent=5 // pred_check_branch
        %162 = sbr.rel (%p160) target = $region24
      $region23: #{tpu_custom_call.1} parent=5 // pred_region
        // Predicated region
        $region25: #{tpu_custom_call.1} parent=23 // pred_check
          %p163 = pneg %p90
        $region26: #{tpu_custom_call.1} parent=23 // pred_check_branch
          %165 = sbr.rel (%p163) target = $region28
        $region27: #{tpu_custom_call.1} parent=23 // pred_region
          %p166 = scmp.lt.s32.totalorder %s21, 1
          %s167 = scalar_select %p166, %s21, 1
          %p168 = scmp.lt.s32.totalorder %s22, 0
          %s169 = scalar_select %p168, %s22, 0
          %s170 = sadd.s32 %s169, %s167
          %s171 = smul.addr %s170, 2
          %s172 = scalar_lea.vmem %s2, %s171
        $region28: #{tpu_custom_call.1} parent=23 // pred_fallthru
          _
      $region24: #{tpu_custom_call.1} parent=5 // pred_fallthru
        _
      %p173 = scmp.le.s32.totalorder 1, %s14
      %p174 = scmp.lt.s32.totalorder %s14, 3
      %p175 = pnand %p173, %p174
      %p176 = pneg %p175
      // Predicated region
      $region29: #{tpu_custom_call.1} parent=5 // pred_check
        _
      $region30: #{tpu_custom_call.1} parent=5 // pred_check_branch
        %178 = sbr.rel (%p175) target = $region32
      $region31: #{tpu_custom_call.1} parent=5 // pred_region
        %s179 = ssub.s32 %s14, 1
        // Predicated region
        $region33: #{tpu_custom_call.1} parent=31 // pred_check
          %p180 = pneg %p47
        $region34: #{tpu_custom_call.1} parent=31 // pred_check_branch
          %182 = sbr.rel (%p180) target = $region36
        $region35: #{tpu_custom_call.1} parent=31 // pred_region
          %183 = dma.done [#allocation4], 16
        $region36: #{tpu_custom_call.1} parent=31 // pred_fallthru
          _
        // Predicated region
        $region37: #{tpu_custom_call.1} parent=31 // pred_check
          %p184 = pneg %p68
        $region38: #{tpu_custom_call.1} parent=31 // pred_check_branch
          %186 = sbr.rel (%p184) target = $region40
        $region39: #{tpu_custom_call.1} parent=31 // pred_region
          %187 = dma.done [#allocation5], 16
        $region40: #{tpu_custom_call.1} parent=31 // pred_fallthru
          _
        %188 = sfence
        %p189 = pneg %p47
        %p190 = pneg %p44
        %p191 = pneg %p68
        %p192 = pneg %p65
        %p193 = scmp.lt.s32.totalorder %s23, 1
        %s194 = scalar_select %p193, %s23, 1
        %p195 = scmp.lt.s32.totalorder %s24, 0
        %s196 = scalar_select %p195, %s24, 0
        %s197 = sadd.s32 %s196, %s194
        %s198 = smul.addr %s197, 2
        %s199 = scalar_lea.vmem %s2, %s198
        %p200 = pneg %p96
        %p201 = pneg %p93
        %p202 = pneg %p124
        %p203 = pneg %p121
        %s204 = sand.u32 %s111, 1
        %s205 = scalar_lea.sflag [#allocation3], %s204
        %s206 = sand.u32 %s111, 1
        %s207 = smul.addr %s206, 4
        %s208 = scalar_lea.vmem [#allocation7], %s207
        %p209 = scmp.lt.s32.totalorder %s23, 1
        %s210 = scalar_select %p209, %s23, 1
        %p211 = scmp.lt.s32.totalorder %s24, 0
        %s212 = scalar_select %p211, %s24, 0
        %s213 = sadd.s32 %s212, %s210
        %s214 = smul.addr %s213, 2
        %s215 = scalar_lea.vmem %s2, %s214
        %v216 = vld [vmem:[%s215] sm:$0x3]
        %s217 = sld [smem:[#allocation2]]
        %v218 = vstv %s217
        %v219 = vmul.f32 %v216, %v218
        %s220 = sld [smem:[#allocation6]]
        %v221 = vstv %s220
        %v222 = vadd.f32 %v219, %v221
        %v223 = vmax.f32 %v222, 0.3
        %v224 = vmin.f32 %v223, 0.5
        %225 = vst [vmem:[%s208] sm:$0x3] %v224
        %s226 = sld [smem:[#allocation2 + $0x1]]
        %v227 = vstv %s226
        %v228 = vmul.f32 %v216, %v227
        %s229 = sld [smem:[#allocation6 + $0x1]]
        %v230 = vstv %s229
        %v231 = vadd.f32 %v228, %v230
        %v232 = vmax.f32 %v231, 0.3
        %v233 = vmin.f32 %v232, 0.5
        %s234 = scalar_lea.vmem %s208, 2 [#allocation7]
        %235 = vst [vmem:[%s234] sm:$0x3] %v233
        %s236 = sand.u32 %s111, 1
        %s237 = scalar_lea.sflag [#allocation3], %s236
        %s238 = sand.u32 %s111, 1
        %s239 = smul.addr %s238, 4
        %s240 = scalar_lea.vmem [#allocation7], %s239
        // Predicated region
        $region41: #{tpu_custom_call.1} parent=31 // pred_check
          %p241 = pneg %p121
        $region42: #{tpu_custom_call.1} parent=31 // pred_check_branch
          %243 = sbr.rel (%p241) target = $region44
        $region43: #{tpu_custom_call.1} parent=31 // pred_region
          %s245 = ssub.s32 64, 64
          %246 = vsyncadd %s237, %s245
          %s247 = smul.addr %s23, 2
          %s248 = sadd.s32 %s24, %s247
          %s249 = smul.addr %s248, 32
          %s250 = scalar_lea.hbm %s3, %s249
          %s251 = sshll.u32 %s240, 4
          %s252 = int_to_ptr.vmem [resolvable:$true] %s251
          %257 = dma.vmem_to_hbm [thread:$0]  %s252, 64, %s250, %s237, 32, 32, 2
        $region44: #{tpu_custom_call.1} parent=31 // pred_fallthru
          _
      $region32: #{tpu_custom_call.1} parent=5 // pred_fallthru
        _
      %p258 = scmp.le.s32.totalorder 2, %s14
      // Predicated region
      $region45: #{tpu_custom_call.1} parent=5 // pred_check
        %p259 = pneg %p258
      $region46: #{tpu_custom_call.1} parent=5 // pred_check_branch
        %261 = sbr.rel (%p259) target = $region48
      $region47: #{tpu_custom_call.1} parent=5 // pred_region
        %s262 = ssub.s32 %s14, 2
        // Predicated region
        $region49: #{tpu_custom_call.1} parent=47 // pred_check
          %p263 = pneg %p127
        $region50: #{tpu_custom_call.1} parent=47 // pred_check_branch
          %265 = sbr.rel (%p263) target = $region52
        $region51: #{tpu_custom_call.1} parent=47 // pred_region
          %s266 = sand.u32 %s112, 1
          %s267 = scalar_lea.sflag [#allocation3], %s266
          %s268 = sand.u32 %s112, 1
          %s269 = smul.addr %s268, 4
          %s270 = scalar_lea.vmem [#allocation7], %s269
          %271 = dma.done %s267, 64
        $region52: #{tpu_custom_call.1} parent=47 // pred_fallthru
          _
      $region48: #{tpu_custom_call.1} parent=5 // pred_fallthru
        _
    $region6: #{tpu_custom_call.1} parent=1 // loop_footer
      %s18 = sadd.s32 1, %s14
    $region7: #{tpu_custom_call.1} parent=1 // loop_footer_branch
      %13 = sbr.rel target = $region3
    $region8: #{tpu_custom_call.1} parent=1 // loop_exit
      _
    %272 = vsyncpa [#allocation3], 1
    %s273 = scalar_lea.sflag [#allocation3], 1
    %274 = vsyncpa %s273, 1
    %275 = vsyncpa [#allocation4], 1
    %s276 = scalar_lea.sflag [#allocation4], 1
    %277 = vsyncpa %s276, 1
    %278 = vsyncpa [#allocation5], 1
    %s279 = scalar_lea.sflag [#allocation5], 1
    %280 = vsyncpa %s279, 1

</llo_original>
